<compile_context>
chip_gen: v7x
topology: tpu7x:2x2x1
jax: 0.10.0
libtpu: 0.0.40
codegen_flags: <defaults>
</compile_context>

<pallas_src>
import functools

import jax
import jax.numpy as jnp
from jax.experimental import pallas as pl
from jax.experimental.pallas import tpu as pltpu


def _log_sigmoid(x):
    # numerically stable: logsigmoid(x) = min(x, 0) - log1p(exp(-|x|))
    return jnp.minimum(x, 0.0) - jnp.log1p(jnp.exp(-jnp.abs(x)))


def _unsupervised_kernel(src_ref, pos_ref, negs_ref,   # SMEM scalar-prefetch, (BW_pad,) i32
                         emb_ref, ctx_ref,             # VMEM-resident tables, (V, D) f32
                         loss_ref,                     # (1, 1) f32 output
                         acc_ref,                      # (1, 1) f32 VMEM scratch accumulator
                         *, tile_bw, bw, batch):
    i = pl.program_id(0)

    @pl.when(i == 0)
    def _init():
        acc_ref[...] = jnp.zeros_like(acc_ref)

    base = i * tile_bw

    def gather_rows(table_ref, idx_ref):
        # Direct row gather from the VMEM-resident table using SMEM indices
        # (replaces the old one-hot MXU gather).
        rows = [table_ref[pl.ds(idx_ref[base + r], 1), :] for r in range(tile_bw)]
        return jnp.concatenate(rows, axis=0)            # (tile_bw, D)

    e = gather_rows(emb_ref, src_ref)     # embedding        (tile_bw, D)
    p = gather_rows(ctx_ref, pos_ref)     # pos_embedding    (tile_bw, D)
    n = gather_rows(ctx_ref, negs_ref)    # negs_embedding   (tile_bw, D)

    logits = jnp.sum(e * p, axis=1, keepdims=True)       # (tile_bw, 1)
    neg_logits = jnp.sum(e * n, axis=1, keepdims=True)   # (tile_bw, 1)
    per_pair = _log_sigmoid(logits) + _log_sigmoid(-neg_logits)

    # Mask padded rows of the (possibly ragged) last tile.
    gid = base + jax.lax.broadcasted_iota(jnp.int32, (tile_bw, 1), 0)
    per_pair = jnp.where(gid < bw, per_pair, 0.0)

    acc_ref[...] += jnp.sum(per_pair, axis=(0, 1), keepdims=True)

    @pl.when(i == pl.num_programs(0) - 1)
    def _finalize():
        # mean over batch of (sum over walk positions) == total / B
        loss_ref[...] = -acc_ref[...] / jnp.float32(batch)


def unsupervised_loss(src, pos, negs, emb_table, ctx_table, *, tile_bw=8):
    """src/pos/negs: (B, W) int32 node ids; tables: (V, D) f32. Returns scalar loss."""
    B, W = src.shape
    BW = B * W
    V, D = emb_table.shape

    tile_bw = int(min(tile_bw, BW))
    n_tiles = pl.cdiv(BW, tile_bw)
    bw_pad = n_tiles * tile_bw

    def prep(idx):
        # clip matches JAX gather semantics for out-of-range ids; pad last tile
        flat = jnp.clip(idx.reshape(-1).astype(jnp.int32), 0, V - 1)
        return jnp.pad(flat, (0, bw_pad - BW))

    src_f, pos_f, negs_f = prep(src), prep(pos), prep(negs)

    # Tables: full-array blocks, constant index_map -> stay VMEM-resident
    # across the BW grid (DMA'd once).
    tab_spec = pl.BlockSpec((V, D), lambda i, s, p, n: (0, 0))

    out = pl.pallas_call(
        functools.partial(_unsupervised_kernel, tile_bw=tile_bw, bw=BW, batch=B),
        out_shape=jax.ShapeDtypeStruct((1, 1), jnp.float32),
        grid_spec=pltpu.PrefetchScalarGridSpec(
            num_scalar_prefetch=3,
            grid=(n_tiles,),
            in_specs=[tab_spec, tab_spec],
            out_specs=pl.BlockSpec((1, 1), lambda i, s, p, n: (0, 0)),
            scratch_shapes=[pltpu.VMEM((1, 1), jnp.float32)],
        ),
        compiler_params=pltpu.CompilerParams(
            dimension_semantics=("arbitrary",)),
    )(src_f, pos_f, negs_f, emb_table, ctx_table)
    return out[0, 0]


def reference_loss(src, pos, negs, emb_table, ctx_table):
    """Pure-JAX reference mirroring the PyTorch forward pass."""
    e = emb_table[src]          # (B, W, D)
    p = ctx_table[pos]          # (B, W, D)
    n = ctx_table[negs]         # (B, W, D)
    logits = jnp.sum(e * p, axis=2)          # (B, W)
    neg_logits = jnp.sum(e * n, axis=2)      # (B, W)
    pos_loss = jax.nn.log_sigmoid(logits).sum(axis=-1)        # (B,)
    negs_loss = jax.nn.log_sigmoid(-neg_logits).sum(axis=-1)  # (B,)
    return -(pos_loss + negs_loss).mean()


if __name__ == "__main__":
    node_nums = 32
    embedding_dim = 32
    B, W = 4, 8
    V = node_nums + 1   # torch.nn.Embedding(node_nums + 1, embedding_dim)

    key = jax.random.PRNGKey(0)
    k1, k2, k3, k4, k5 = jax.random.split(key, 5)

    # torch.nn.Embedding default init is N(0, 1); context_embedder is None in
    # the base class, so instantiate a second table of the same shape here.
    emb_table = jax.random.normal(k1, (V, embedding_dim), jnp.float32)
    ctx_table = jax.random.normal(k2, (V, embedding_dim), jnp.float32)

    # TODO(synk): get_sample() raises NotImplementedError in the PyTorch base
    # class; generate (src, pos, negs) index triples in the host wrapper.
    src = jax.random.randint(k3, (B, W), 0, V, jnp.int32)
    pos = jax.random.randint(k4, (B, W), 0, V, jnp.int32)
    negs = jax.random.randint(k5, (B, W), 0, V, jnp.int32)

    loss = unsupervised_loss(src, pos, negs, emb_table, ctx_table)
    jax.block_until_ready(loss)

    ref = reference_loss(src, pos, negs, emb_table, ctx_table)
    assert jnp.allclose(loss, ref, rtol=2e-5, atol=1e-4), (loss, ref)
    print("KERNEL_OK")
</pallas_src>

<mosaic_0001>
module attributes {stable_mosaic.version = 11 : i64} {
  func.func @_unsupervised_kernel(%arg0: i32, %arg1: memref<32xi32, #tpu.memory_space<smem>>, %arg2: memref<32xi32, #tpu.memory_space<smem>>, %arg3: memref<32xi32, #tpu.memory_space<smem>>, %arg4: memref<33x32xf32, #tpu.memory_space<vmem>>, %arg5: memref<33x32xf32, #tpu.memory_space<vmem>>, %arg6: memref<1x1xf32, #tpu.memory_space<vmem>>, %arg7: memref<1x1xf32, #tpu.memory_space<vmem>>) attributes {dimension_semantics = [#tpu.dimension_semantics<arbitrary>], iteration_bounds = array<i64: 4>, scalar_prefetch = 3 : i64, scratch_operands = 1 : i64, tpu.core_type = #tpu.core_type<tc>, window_params = [{pipeline_mode = #tpu.pipeline_mode<synchronous>, transform_indices = @transform_0, window_bounds = array<i64: 33, 32>}, {pipeline_mode = #tpu.pipeline_mode<synchronous>, transform_indices = @transform_1, window_bounds = array<i64: 33, 32>}, {pipeline_mode = #tpu.pipeline_mode<synchronous>, transform_indices = @transform_2, window_bounds = array<i64: 1, 1>}]} {
    %c0_i32 = arith.constant 0 : i32
    %0 = arith.cmpi eq, %arg0, %c0_i32 : i32
    %1 = arith.extui %0 : i1 to i32
    %c0_i32_0 = arith.constant 0 : i32
    %2 = arith.cmpi ne, %1, %c0_i32_0 : i32
    scf.if %2 {
      %cst_55 = arith.constant 0.000000e+00 : f32
      %170 = vector.broadcast %cst_55 : f32 to vector<1x1xf32>
      %c0_56 = arith.constant 0 : index
      %c0_57 = arith.constant 0 : index
      %171 = vector.load %arg7[%c0_56, %c0_57] : memref<1x1xf32, #tpu.memory_space<vmem>>, vector<1x1xf32>
      tpu.vector_store %arg7[%c0_56, %c0_57], %170 {strides = array<i32>} : memref<1x1xf32, #tpu.memory_space<vmem>>, vector<1x1xf32>,
    } else {
    }
    %c8_i32 = arith.constant 8 : i32
    %3 = arith.muli %arg0, %c8_i32 : i32
    %c0_i32_1 = arith.constant 0 : i32
    %4 = arith.addi %3, %c0_i32_1 : i32
    %5 = arith.index_cast %4 : i32 to index
    %6 = memref.load %arg1[%5] : memref<32xi32, #tpu.memory_space<smem>>
    %7 = arith.index_cast %6 : i32 to index
    %c0 = arith.constant 0 : index
    %8 = vector.load %arg4[%7, %c0] : memref<33x32xf32, #tpu.memory_space<vmem>>, vector<1x32xf32>
    %c1_i32 = arith.constant 1 : i32
    %9 = arith.addi %3, %c1_i32 : i32
    %10 = arith.index_cast %9 : i32 to index
    %11 = memref.load %arg1[%10] : memref<32xi32, #tpu.memory_space<smem>>
    %12 = arith.index_cast %11 : i32 to index
    %c0_2 = arith.constant 0 : index
    %13 = vector.load %arg4[%12, %c0_2] : memref<33x32xf32, #tpu.memory_space<vmem>>, vector<1x32xf32>
    %c2_i32 = arith.constant 2 : i32
    %14 = arith.addi %3, %c2_i32 : i32
    %15 = arith.index_cast %14 : i32 to index
    %16 = memref.load %arg1[%15] : memref<32xi32, #tpu.memory_space<smem>>
    %17 = arith.index_cast %16 : i32 to index
    %c0_3 = arith.constant 0 : index
    %18 = vector.load %arg4[%17, %c0_3] : memref<33x32xf32, #tpu.memory_space<vmem>>, vector<1x32xf32>
    %c3_i32 = arith.constant 3 : i32
    %19 = arith.addi %3, %c3_i32 : i32
    %20 = arith.index_cast %19 : i32 to index
    %21 = memref.load %arg1[%20] : memref<32xi32, #tpu.memory_space<smem>>
    %22 = arith.index_cast %21 : i32 to index
    %c0_4 = arith.constant 0 : index
    %23 = vector.load %arg4[%22, %c0_4] : memref<33x32xf32, #tpu.memory_space<vmem>>, vector<1x32xf32>
    %c4_i32 = arith.constant 4 : i32
    %24 = arith.addi %3, %c4_i32 : i32
    %25 = arith.index_cast %24 : i32 to index
    %26 = memref.load %arg1[%25] : memref<32xi32, #tpu.memory_space<smem>>
    %27 = arith.index_cast %26 : i32 to index
    %c0_5 = arith.constant 0 : index
    %28 = vector.load %arg4[%27, %c0_5] : memref<33x32xf32, #tpu.memory_space<vmem>>, vector<1x32xf32>
    %c5_i32 = arith.constant 5 : i32
    %29 = arith.addi %3, %c5_i32 : i32
    %30 = arith.index_cast %29 : i32 to index
    %31 = memref.load %arg1[%30] : memref<32xi32, #tpu.memory_space<smem>>
    %32 = arith.index_cast %31 : i32 to index
    %c0_6 = arith.constant 0 : index
    %33 = vector.load %arg4[%32, %c0_6] : memref<33x32xf32, #tpu.memory_space<vmem>>, vector<1x32xf32>
    %c6_i32 = arith.constant 6 : i32
    %34 = arith.addi %3, %c6_i32 : i32
    %35 = arith.index_cast %34 : i32 to index
    %36 = memref.load %arg1[%35] : memref<32xi32, #tpu.memory_space<smem>>
    %37 = arith.index_cast %36 : i32 to index
    %c0_7 = arith.constant 0 : index
    %38 = vector.load %arg4[%37, %c0_7] : memref<33x32xf32, #tpu.memory_space<vmem>>, vector<1x32xf32>
    %c7_i32 = arith.constant 7 : i32
    %39 = arith.addi %3, %c7_i32 : i32
    %40 = arith.index_cast %39 : i32 to index
    %41 = memref.load %arg1[%40] : memref<32xi32, #tpu.memory_space<smem>>
    %42 = arith.index_cast %41 : i32 to index
    %c0_8 = arith.constant 0 : index
    %43 = vector.load %arg4[%42, %c0_8] : memref<33x32xf32, #tpu.memory_space<vmem>>, vector<1x32xf32>
    %44 = tpu.concatenate %8, %13, %18, %23, %28, %33, %38, %43 in 0 : vector<1x32xf32>, vector<1x32xf32>, vector<1x32xf32>, vector<1x32xf32>, vector<1x32xf32>, vector<1x32xf32>, vector<1x32xf32>, vector<1x32xf32> -> vector<8x32xf32>
    %c0_i32_9 = arith.constant 0 : i32
    %45 = arith.addi %3, %c0_i32_9 : i32
    %46 = arith.index_cast %45 : i32 to index
    %47 = memref.load %arg2[%46] : memref<32xi32, #tpu.memory_space<smem>>
    %48 = arith.index_cast %47 : i32 to index
    %c0_10 = arith.constant 0 : index
    %49 = vector.load %arg5[%48, %c0_10] : memref<33x32xf32, #tpu.memory_space<vmem>>, vector<1x32xf32>
    %c1_i32_11 = arith.constant 1 : i32
    %50 = arith.addi %3, %c1_i32_11 : i32
    %51 = arith.index_cast %50 : i32 to index
    %52 = memref.load %arg2[%51] : memref<32xi32, #tpu.memory_space<smem>>
    %53 = arith.index_cast %52 : i32 to index
    %c0_12 = arith.constant 0 : index
    %54 = vector.load %arg5[%53, %c0_12] : memref<33x32xf32, #tpu.memory_space<vmem>>, vector<1x32xf32>
    %c2_i32_13 = arith.constant 2 : i32
    %55 = arith.addi %3, %c2_i32_13 : i32
    %56 = arith.index_cast %55 : i32 to index
    %57 = memref.load %arg2[%56] : memref<32xi32, #tpu.memory_space<smem>>
    %58 = arith.index_cast %57 : i32 to index
    %c0_14 = arith.constant 0 : index
    %59 = vector.load %arg5[%58, %c0_14] : memref<33x32xf32, #tpu.memory_space<vmem>>, vector<1x32xf32>
    %c3_i32_15 = arith.constant 3 : i32
    %60 = arith.addi %3, %c3_i32_15 : i32
    %61 = arith.index_cast %60 : i32 to index
    %62 = memref.load %arg2[%61] : memref<32xi32, #tpu.memory_space<smem>>
    %63 = arith.index_cast %62 : i32 to index
    %c0_16 = arith.constant 0 : index
    %64 = vector.load %arg5[%63, %c0_16] : memref<33x32xf32, #tpu.memory_space<vmem>>, vector<1x32xf32>
    %c4_i32_17 = arith.constant 4 : i32
    %65 = arith.addi %3, %c4_i32_17 : i32
    %66 = arith.index_cast %65 : i32 to index
    %67 = memref.load %arg2[%66] : memref<32xi32, #tpu.memory_space<smem>>
    %68 = arith.index_cast %67 : i32 to index
    %c0_18 = arith.constant 0 : index
    %69 = vector.load %arg5[%68, %c0_18] : memref<33x32xf32, #tpu.memory_space<vmem>>, vector<1x32xf32>
    %c5_i32_19 = arith.constant 5 : i32
    %70 = arith.addi %3, %c5_i32_19 : i32
    %71 = arith.index_cast %70 : i32 to index
    %72 = memref.load %arg2[%71] : memref<32xi32, #tpu.memory_space<smem>>
    %73 = arith.index_cast %72 : i32 to index
    %c0_20 = arith.constant 0 : index
    %74 = vector.load %arg5[%73, %c0_20] : memref<33x32xf32, #tpu.memory_space<vmem>>, vector<1x32xf32>
    %c6_i32_21 = arith.constant 6 : i32
    %75 = arith.addi %3, %c6_i32_21 : i32
    %76 = arith.index_cast %75 : i32 to index
    %77 = memref.load %arg2[%76] : memref<32xi32, #tpu.memory_space<smem>>
    %78 = arith.index_cast %77 : i32 to index
    %c0_22 = arith.constant 0 : index
    %79 = vector.load %arg5[%78, %c0_22] : memref<33x32xf32, #tpu.memory_space<vmem>>, vector<1x32xf32>
    %c7_i32_23 = arith.constant 7 : i32
    %80 = arith.addi %3, %c7_i32_23 : i32
    %81 = arith.index_cast %80 : i32 to index
    %82 = memref.load %arg2[%81] : memref<32xi32, #tpu.memory_space<smem>>
    %83 = arith.index_cast %82 : i32 to index
    %c0_24 = arith.constant 0 : index
    %84 = vector.load %arg5[%83, %c0_24] : memref<33x32xf32, #tpu.memory_space<vmem>>, vector<1x32xf32>
    %85 = tpu.concatenate %49, %54, %59, %64, %69, %74, %79, %84 in 0 : vector<1x32xf32>, vector<1x32xf32>, vector<1x32xf32>, vector<1x32xf32>, vector<1x32xf32>, vector<1x32xf32>, vector<1x32xf32>, vector<1x32xf32> -> vector<8x32xf32>
    %c0_i32_25 = arith.constant 0 : i32
    %86 = arith.addi %3, %c0_i32_25 : i32
    %87 = arith.index_cast %86 : i32 to index
    %88 = memref.load %arg3[%87] : memref<32xi32, #tpu.memory_space<smem>>
    %89 = arith.index_cast %88 : i32 to index
    %c0_26 = arith.constant 0 : index
    %90 = vector.load %arg5[%89, %c0_26] : memref<33x32xf32, #tpu.memory_space<vmem>>, vector<1x32xf32>
    %c1_i32_27 = arith.constant 1 : i32
    %91 = arith.addi %3, %c1_i32_27 : i32
    %92 = arith.index_cast %91 : i32 to index
    %93 = memref.load %arg3[%92] : memref<32xi32, #tpu.memory_space<smem>>
    %94 = arith.index_cast %93 : i32 to index
    %c0_28 = arith.constant 0 : index
    %95 = vector.load %arg5[%94, %c0_28] : memref<33x32xf32, #tpu.memory_space<vmem>>, vector<1x32xf32>
    %c2_i32_29 = arith.constant 2 : i32
    %96 = arith.addi %3, %c2_i32_29 : i32
    %97 = arith.index_cast %96 : i32 to index
    %98 = memref.load %arg3[%97] : memref<32xi32, #tpu.memory_space<smem>>
    %99 = arith.index_cast %98 : i32 to index
    %c0_30 = arith.constant 0 : index
    %100 = vector.load %arg5[%99, %c0_30] : memref<33x32xf32, #tpu.memory_space<vmem>>, vector<1x32xf32>
    %c3_i32_31 = arith.constant 3 : i32
    %101 = arith.addi %3, %c3_i32_31 : i32
    %102 = arith.index_cast %101 : i32 to index
    %103 = memref.load %arg3[%102] : memref<32xi32, #tpu.memory_space<smem>>
    %104 = arith.index_cast %103 : i32 to index
    %c0_32 = arith.constant 0 : index
    %105 = vector.load %arg5[%104, %c0_32] : memref<33x32xf32, #tpu.memory_space<vmem>>, vector<1x32xf32>
    %c4_i32_33 = arith.constant 4 : i32
    %106 = arith.addi %3, %c4_i32_33 : i32
    %107 = arith.index_cast %106 : i32 to index
    %108 = memref.load %arg3[%107] : memref<32xi32, #tpu.memory_space<smem>>
    %109 = arith.index_cast %108 : i32 to index
    %c0_34 = arith.constant 0 : index
    %110 = vector.load %arg5[%109, %c0_34] : memref<33x32xf32, #tpu.memory_space<vmem>>, vector<1x32xf32>
    %c5_i32_35 = arith.constant 5 : i32
    %111 = arith.addi %3, %c5_i32_35 : i32
    %112 = arith.index_cast %111 : i32 to index
    %113 = memref.load %arg3[%112] : memref<32xi32, #tpu.memory_space<smem>>
    %114 = arith.index_cast %113 : i32 to index
    %c0_36 = arith.constant 0 : index
    %115 = vector.load %arg5[%114, %c0_36] : memref<33x32xf32, #tpu.memory_space<vmem>>, vector<1x32xf32>
    %c6_i32_37 = arith.constant 6 : i32
    %116 = arith.addi %3, %c6_i32_37 : i32
    %117 = arith.index_cast %116 : i32 to index
    %118 = memref.load %arg3[%117] : memref<32xi32, #tpu.memory_space<smem>>
    %119 = arith.index_cast %118 : i32 to index
    %c0_38 = arith.constant 0 : index
    %120 = vector.load %arg5[%119, %c0_38] : memref<33x32xf32, #tpu.memory_space<vmem>>, vector<1x32xf32>
    %c7_i32_39 = arith.constant 7 : i32
    %121 = arith.addi %3, %c7_i32_39 : i32
    %122 = arith.index_cast %121 : i32 to index
    %123 = memref.load %arg3[%122] : memref<32xi32, #tpu.memory_space<smem>>
    %124 = arith.index_cast %123 : i32 to index
    %c0_40 = arith.constant 0 : index
    %125 = vector.load %arg5[%124, %c0_40] : memref<33x32xf32, #tpu.memory_space<vmem>>, vector<1x32xf32>
    %126 = tpu.concatenate %90, %95, %100, %105, %110, %115, %120, %125 in 0 : vector<1x32xf32>, vector<1x32xf32>, vector<1x32xf32>, vector<1x32xf32>, vector<1x32xf32>, vector<1x32xf32>, vector<1x32xf32>, vector<1x32xf32> -> vector<8x32xf32>
    %127 = arith.mulf %44, %85 : vector<8x32xf32>
    %cst = arith.constant dense<0.000000e+00> : vector<8xf32>
    %128 = vector.multi_reduction <add>, %127, %cst [1] : vector<8x32xf32> to vector<8xf32>
    %129 = vector.shape_cast %128 : vector<8xf32> to vector<8x1xf32>
    %130 = arith.mulf %44, %126 : vector<8x32xf32>
    %cst_41 = arith.constant dense<0.000000e+00> : vector<8xf32>
    %131 = vector.multi_reduction <add>, %130, %cst_41 [1] : vector<8x32xf32> to vector<8xf32>
    %132 = vector.shape_cast %131 : vector<8xf32> to vector<8x1xf32>
    %cst_42 = arith.constant 0.000000e+00 : f32
    %133 = vector.broadcast %cst_42 : f32 to vector<8x1xf32>
    %134 = arith.minimumf %129, %133 : vector<8x1xf32>
    %135 = math.absf %129 : vector<8x1xf32>
    %cst_43 = arith.constant 0.000000e+00 : f32
    %136 = vector.broadcast %cst_43 : f32 to vector<8x1xf32>
    %137 = arith.subf %136, %135 : vector<8x1xf32>
    %138 = math.exp %137 : vector<8x1xf32>
    %139 = math.log1p %138 : vector<8x1xf32>
    %140 = arith.subf %134, %139 : vector<8x1xf32>
    %cst_44 = arith.constant 0.000000e+00 : f32
    %141 = vector.broadcast %cst_44 : f32 to vector<8x1xf32>
    %142 = arith.subf %141, %132 : vector<8x1xf32>
    %cst_45 = arith.constant 0.000000e+00 : f32
    %143 = vector.broadcast %cst_45 : f32 to vector<8x1xf32>
    %144 = arith.minimumf %142, %143 : vector<8x1xf32>
    %145 = math.absf %142 : vector<8x1xf32>
    %cst_46 = arith.constant 0.000000e+00 : f32
    %146 = vector.broadcast %cst_46 : f32 to vector<8x1xf32>
    %147 = arith.subf %146, %145 : vector<8x1xf32>
    %148 = math.exp %147 : vector<8x1xf32>
    %149 = math.log1p %148 : vector<8x1xf32>
    %150 = arith.subf %144, %149 : vector<8x1xf32>
    %151 = arith.addf %140, %150 : vector<8x1xf32>
    %152 = tpu.iota {dimensions = array<i32: 0>} : vector<8x1xi32>
    %153 = vector.broadcast %3 : i32 to vector<8x1xi32>
    %154 = arith.addi %153, %152 : vector<8x1xi32>
    %c32_i32 = arith.constant 32 : i32
    %155 = vector.broadcast %c32_i32 : i32 to vector<8x1xi32>
    %156 = arith.cmpi slt, %154, %155 : vector<8x1xi32>
    %cst_47 = arith.constant 0.000000e+00 : f32
    %157 = vector.broadcast %cst_47 : f32 to vector<8x1xf32>
    %158 = arith.select %156, %151, %157 : vector<8x1xi1>, vector<8x1xf32>
    %c0_48 = arith.constant 0 : index
    %c0_49 = arith.constant 0 : index
    %159 = vector.load %arg7[%c0_48, %c0_49] : memref<1x1xf32, #tpu.memory_space<vmem>>, vector<1x1xf32>
    %160 = vector.shape_cast %158 : vector<8x1xf32> to vector<1x8x1xf32>
    %cst_50 = arith.constant dense<0.000000e+00> : vector<1xf32>
    %161 = vector.multi_reduction <add>, %160, %cst_50 [1, 2] : vector<1x8x1xf32> to vector<1xf32>
    %162 = vector.shape_cast %161 : vector<1xf32> to vector<1x1x1xf32>
    %163 = vector.extract %162[0, 0, 0] : f32 from vector<1x1x1xf32>
    %164 = vector.broadcast %163 : f32 to vector<1x1xf32>
    %165 = arith.addf %159, %164 : vector<1x1xf32>
    %c0_51 = arith.constant 0 : index
    %c0_52 = arith.constant 0 : index
    %166 = vector.load %arg7[%c0_51, %c0_52] : memref<1x1xf32, #tpu.memory_space<vmem>>, vector<1x1xf32>
    tpu.vector_store %arg7[%c0_51, %c0_52], %165 {strides = array<i32>} : memref<1x1xf32, #tpu.memory_space<vmem>>, vector<1x1xf32>,
    %c3_i32_53 = arith.constant 3 : i32
    %167 = arith.cmpi eq, %arg0, %c3_i32_53 : i32
    %168 = arith.extui %167 : i1 to i32
    %c0_i32_54 = arith.constant 0 : i32
    %169 = arith.cmpi ne, %168, %c0_i32_54 : i32
    scf.if %169 {
      %c0_55 = arith.constant 0 : index
      %c0_56 = arith.constant 0 : index
      %170 = vector.load %arg7[%c0_55, %c0_56] : memref<1x1xf32, #tpu.memory_space<vmem>>, vector<1x1xf32>
      %cst_57 = arith.constant 0.000000e+00 : f32
      %171 = vector.broadcast %cst_57 : f32 to vector<1x1xf32>
      %172 = arith.subf %171, %170 : vector<1x1xf32>
      %cst_58 = arith.constant 4.000000e+00 : f32
      %173 = vector.broadcast %cst_58 : f32 to vector<1x1xf32>
      %174 = arith.divf %172, %173 : vector<1x1xf32>
      %c0_59 = arith.constant 0 : index
      %c0_60 = arith.constant 0 : index
      %175 = vector.load %arg6[%c0_59, %c0_60] : memref<1x1xf32, #tpu.memory_space<vmem>>, vector<1x1xf32>
      tpu.vector_store %arg6[%c0_59, %c0_60], %174 {strides = array<i32>} : memref<1x1xf32, #tpu.memory_space<vmem>>, vector<1x1xf32>,
    } else {
    }
    return
  }
  func.func @transform_0(%arg0: i32, %arg1: memref<32xi32, #tpu.memory_space<smem>>, %arg2: memref<32xi32, #tpu.memory_space<smem>>, %arg3: memref<32xi32, #tpu.memory_space<smem>>) -> (i32, i32) {
    %c0_i32 = arith.constant 0 : i32
    %c0_i32_0 = arith.constant 0 : i32
    %c0_i32_1 = arith.constant 0 : i32
    return %c0_i32, %c0_i32_0 : i32, i32
  }
  func.func @transform_1(%arg0: i32, %arg1: memref<32xi32, #tpu.memory_space<smem>>, %arg2: memref<32xi32, #tpu.memory_space<smem>>, %arg3: memref<32xi32, #tpu.memory_space<smem>>) -> (i32, i32) {
    %c0_i32 = arith.constant 0 : i32
    %c0_i32_0 = arith.constant 0 : i32
    %c0_i32_1 = arith.constant 0 : i32
    return %c0_i32, %c0_i32_0 : i32, i32
  }
  func.func @transform_2(%arg0: i32, %arg1: memref<32xi32, #tpu.memory_space<smem>>, %arg2: memref<32xi32, #tpu.memory_space<smem>>, %arg3: memref<32xi32, #tpu.memory_space<smem>>) -> (i32, i32) {
    %c0_i32 = arith.constant 0 : i32
    %c0_i32_0 = arith.constant 0 : i32
    %c0_i32_1 = arith.constant 0 : i32
    return %c0_i32, %c0_i32_0 : i32, i32
  }
}

</mosaic_0001>

<llo_original>
// kernel: tpu_custom_call.1
$region0: #{tpu_custom_call.1}
  #allocation0 [shape = 'u32[]', space=smem, size = 0x4, offset = 0x4, fixed_abs, tag = 'smem constant byte address 0x4 - core index']
  #allocation1 [shape = 'u32[144,128]{1,0:T(1,128)}', space=vmem, size = 0x12000, scoped, tag = 'internal scratch']
  #allocation2 [shape = 'f32[1,1]{1,0:T(1,128)}', space=vmem, size = 0x200, scoped, tag = 'scratch operand']
  #allocation3 [shape = 's32[1]{0}', space=sflag, size = 0x4, scoped, tag = 'scoped memory for tpu_custom_call.1']
  #allocation4 [shape = 'u8[512]{0}', space=smem, size = 0x200, scoped, tag = 'prefetched SMEM operand 0']
  #allocation5 [shape = 'u8[512]{0}', space=smem, size = 0x200, scoped, tag = 'prefetched SMEM operand 1']
  #allocation6 [shape = 'u8[512]{0}', space=smem, size = 0x200, scoped, tag = 'prefetched SMEM operand 2']
  %s0 = inlined_call_operand.vmem [shape: s32[32], index: 0, kind: input, shape index: {}]
  %s1 = inlined_call_operand.vmem [shape: s32[32], index: 1, kind: input, shape index: {}]
  %s2 = inlined_call_operand.vmem [shape: s32[32], index: 2, kind: input, shape index: {}]
  %s3 = inlined_call_operand.vmem [shape: f32[33,32], index: 3, kind: input, shape index: {}]
  %s4 = inlined_call_operand.vmem [shape: f32[33,32], index: 4, kind: input, shape index: {}]
  %s5 = inlined_call_operand.hbm [shape: f32[1,1], index: 5, kind: output, shape index: {}]
  %s6 = sld [smem:[#allocation0]]
  $region49: #{tpu_custom_call.1} parent=0
    _
  %s8 = ssub.s32 1, %s6
  %s9 = scalar_select 0, %s8, %s6
  %s10 = sshll.u32 %s0, 4
  %s11 = int_to_ptr.vmem [resolvable:$true] %s10
  %13 = dma.vmem_to_smem %s11, 16, [#allocation4], [#allocation3]
  %s14 = sshll.u32 %s1, 4
  %s15 = int_to_ptr.vmem [resolvable:$true] %s14
  %17 = dma.vmem_to_smem %s15, 16, [#allocation5], [#allocation3]
  %s18 = sshll.u32 %s2, 4
  %s19 = int_to_ptr.vmem [resolvable:$true] %s18
  %21 = dma.vmem_to_smem %s19, 16, [#allocation6], [#allocation3]
  %22 = dma.done [#allocation3], 48
  %23 = sfence
  $region1: #{tpu_custom_call.1} parent=0
    #allocation7 [shape = 'u8[512]{0}', space=vmem, size = 0x400, scoped, tag = 'output window, operand 0, single buffered']
    #allocation8 [shape = 's32[2]{0}', space=sflag, size = 0x8, scoped, tag = 'scoped memory for tpu_custom_call.1']
    %24 = vsyncpa [#allocation8], 0
    loop: start=0, step=1, limit=6
    $region2: #{tpu_custom_call.1} parent=1 // loop_pre_header
      _
    $region3: #{tpu_custom_call.1} parent=1 // loop_header
      %s26 = sphi 0, %s30
      %p27 = scmp.ge.s32.totalorder %s26, 6
      %s34 = sphi 0, %s34
      %s36 = sphi 0, %s34
      %s37 = sphi 0, %s36
      %s51 = sphi 0, %s37
      %s55 = sphi 0, %s55
      %s57 = sphi 0, %s55
      %s58 = sphi 0, %s57
      %s72 = sphi 0, %s58
      %s76 = sphi 0, %s76
      %s78 = sphi 0, %s76
      %s79 = sphi 0, %s78
      %s93 = sphi 0, %s79
    $region4: #{tpu_custom_call.1} parent=1 // loop_header_branch
      %29 = sbr.rel (%p27) target = $region8
    $region5: #{tpu_custom_call.1} parent=1 // loop_body
      %s31 = ssub.s32 %s26, 1
      %s32 = ssub.s32 %s26, 2
      %s33 = sadd.s32 %s26, 1
      %s35 = sadd.s32 %s34, 1
      %p38 = scmp.eq.s32.totalorder %s26, 3
      %p39 = scmp.ne.s32.totalorder %s34, %s36
      %p40 = scmp.eq.s32.totalorder %s26, 0
      %p41 = por %p39, %p40
      %p42 = scmp.ne.s32.totalorder %s34, %s36
      %p43 = scmp.eq.s32.totalorder %s31, 3
      %p44 = por %p42, %p43
      %p45 = scmp.ne.s32.totalorder %s36, %s37
      %p46 = scmp.eq.s32.totalorder %s31, 0
      %p47 = por %p45, %p46
      %p48 = scmp.ne.s32.totalorder %s36, %s37
      %p49 = scmp.eq.s32.totalorder %s32, 3
      %p50 = por %p48, %p49
      %p52 = scmp.ne.s32.totalorder %s37, %s51
      %p53 = scmp.eq.s32.totalorder %s32, 0
      %p54 = por %p52, %p53
      %s56 = sadd.s32 %s55, 1
      %p59 = scmp.eq.s32.totalorder %s26, 3
      %p60 = scmp.ne.s32.totalorder %s55, %s57
      %p61 = scmp.eq.s32.totalorder %s26, 0
      %p62 = por %p60, %p61
      %p63 = scmp.ne.s32.totalorder %s55, %s57
      %p64 = scmp.eq.s32.totalorder %s31, 3
      %p65 = por %p63, %p64
      %p66 = scmp.ne.s32.totalorder %s57, %s58
      %p67 = scmp.eq.s32.totalorder %s31, 0
      %p68 = por %p66, %p67
      %p69 = scmp.ne.s32.totalorder %s57, %s58
      %p70 = scmp.eq.s32.totalorder %s32, 3
      %p71 = por %p69, %p70
      %p73 = scmp.ne.s32.totalorder %s58, %s72
      %p74 = scmp.eq.s32.totalorder %s32, 0
      %p75 = por %p73, %p74
      %s77 = sadd.s32 %s76, 1
      %p80 = scmp.eq.s32.totalorder %s26, 3
      %p81 = scmp.ne.s32.totalorder %s76, %s78
      %p82 = scmp.eq.s32.totalorder %s26, 0
      %p83 = por %p81, %p82
      %p84 = scmp.ne.s32.totalorder %s76, %s78
      %p85 = scmp.eq.s32.totalorder %s31, 3
      %p86 = por %p84, %p85
      %p87 = scmp.ne.s32.totalorder %s78, %s79
      %p88 = scmp.eq.s32.totalorder %s31, 0
      %p89 = por %p87, %p88
      %p90 = scmp.ne.s32.totalorder %s78, %s79
      %p91 = scmp.eq.s32.totalorder %s32, 3
      %p92 = por %p90, %p91
      %p94 = scmp.ne.s32.totalorder %s79, %s93
      %p95 = scmp.eq.s32.totalorder %s32, 0
      %p96 = por %p94, %p95
      %p97 = scmp.le.s32.totalorder 1, %s26
      %p98 = scmp.lt.s32.totalorder %s26, 5
      %p99 = pnand %p97, %p98
      %p100 = pneg %p99
      // Predicated region
      $region9: #{tpu_custom_call.1} parent=5 // pred_check
        _
      $region10: #{tpu_custom_call.1} parent=5 // pred_check_branch
        %102 = sbr.rel (%p99) target = $region12
      $region11: #{tpu_custom_call.1} parent=5 // pred_region
        %s103 = ssub.s32 %s26, 1
        // Predicated region
        $region13: #{tpu_custom_call.1} parent=11 // pred_check
          %p104 = pneg %p47
        $region14: #{tpu_custom_call.1} parent=11 // pred_check_branch
          %106 = sbr.rel (%p104) target = $region16
        $region15: #{tpu_custom_call.1} parent=11 // pred_region
          _
        $region16: #{tpu_custom_call.1} parent=11 // pred_fallthru
          _
        // Predicated region
        $region17: #{tpu_custom_call.1} parent=11 // pred_check
          %p107 = pneg %p68
        $region18: #{tpu_custom_call.1} parent=11 // pred_check_branch
          %109 = sbr.rel (%p107) target = $region20
        $region19: #{tpu_custom_call.1} parent=11 // pred_region
          _
        $region20: #{tpu_custom_call.1} parent=11 // pred_fallthru
          _
      $region12: #{tpu_custom_call.1} parent=5 // pred_fallthru
        _
      %p110 = scmp.lt.s32.totalorder %s26, 4
      // Predicated region
      $region21: #{tpu_custom_call.1} parent=5 // pred_check
        %p111 = pneg %p110
      $region22: #{tpu_custom_call.1} parent=5 // pred_check_branch
        %113 = sbr.rel (%p111) target = $region24
      $region23: #{tpu_custom_call.1} parent=5 // pred_region
        _
      $region24: #{tpu_custom_call.1} parent=5 // pred_fallthru
        _
      %p114 = scmp.le.s32.totalorder 1, %s26
      %p115 = scmp.lt.s32.totalorder %s26, 5
      %p116 = pnand %p114, %p115
      %p117 = pneg %p116
      // Predicated region
      $region25: #{tpu_custom_call.1} parent=5 // pred_check
        _
      $region26: #{tpu_custom_call.1} parent=5 // pred_check_branch
        %119 = sbr.rel (%p116) target = $region28
      $region27: #{tpu_custom_call.1} parent=5 // pred_region
        %s120 = ssub.s32 %s26, 1
        %p121 = pneg %p47
        %p122 = pneg %p44
        %p123 = pneg %p68
        %p124 = pneg %p65
        %p125 = pneg %p89
        %p126 = pneg %p86
        %p127 = scmp.eq.s32.totalorder %s31, 0
        // Predicated region
        $region29: #{tpu_custom_call.1} parent=27 // pred_check
          %p128 = pneg %p127
        $region30: #{tpu_custom_call.1} parent=27 // pred_check_branch
          %130 = sbr.rel (%p128) target = $region32
        $region31: #{tpu_custom_call.1} parent=27 // pred_region
          %vm131 = vcmask 0
          %132 = vst.msk [vmem:[#allocation2] sm:$0x1] %vm131, 0.0
        $region32: #{tpu_custom_call.1} parent=27 // pred_fallthru
          _
        %s133 = smul.u32 %s31, 8
        %s134 = sld [smem:[#allocation4 + %s133]]
        %s135 = scalar_lea.vmem %s3, %s134
        %v136 = vld [vmem:[%s135] sm:$0x1]
        %s137 = sadd.s32 %s133, 1
        %s138 = sld [smem:[#allocation4 + %s137]]
        %s139 = scalar_lea.vmem %s3, %s138
        %v140 = vld [vmem:[%s139] sm:$0x1]
        %s141 = sadd.s32 %s133, 2
        %s142 = sld [smem:[#allocation4 + %s141]]
        %s143 = scalar_lea.vmem %s3, %s142
        %v144 = vld [vmem:[%s143] sm:$0x1]
        %s145 = sadd.s32 %s133, 3
        %s146 = sld [smem:[#allocation4 + %s145]]
        %s147 = scalar_lea.vmem %s3, %s146
        %v148 = vld [vmem:[%s147] sm:$0x1]
        %s149 = sadd.s32 %s133, 4
        %s150 = sld [smem:[#allocation4 + %s149]]
        %s151 = scalar_lea.vmem %s3, %s150
        %v152 = vld [vmem:[%s151] sm:$0x1]
        %s153 = sadd.s32 %s133, 5
        %s154 = sld [smem:[#allocation4 + %s153]]
        %s155 = scalar_lea.vmem %s3, %s154
        %v156 = vld [vmem:[%s155] sm:$0x1]
        %s157 = sadd.s32 %s133, 6
        %s158 = sld [smem:[#allocation4 + %s157]]
        %s159 = scalar_lea.vmem %s3, %s158
        %v160 = vld [vmem:[%s159] sm:$0x1]
        %s161 = sadd.s32 %s133, 7
        %s162 = sld [smem:[#allocation4 + %s161]]
        %s163 = scalar_lea.vmem %s3, %s162
        %v164 = vld [vmem:[%s163] sm:$0x1]
        %v166 = vrot.slane %v140, 7
        %v169 = vrot.slane %v144, 6
        %v172 = vrot.slane %v148, 5
        %v175 = vrot.slane %v152, 4
        %v178 = vrot.slane %v156, 3
        %v181 = vrot.slane %v160, 2
        %v184 = vrot.slane %v164, 1
        %vm186 = vcmask 1040384
        %v187 = vsel %vm186, %v136, %v166
        %vm188 = vcmask 1041408
        %v189 = vsel %vm188, %v187, %v169
        %vm190 = vcmask 1042432
        %v191 = vsel %vm190, %v189, %v172
        %vm192 = vcmask 1043456
        %v193 = vsel %vm192, %v191, %v175
        %vm194 = vcmask 1044480
        %v195 = vsel %vm194, %v193, %v178
        %vm196 = vcmask 1045504
        %v197 = vsel %vm196, %v195, %v181
        %vm198 = vcmask 1046528
        %v199 = vsel %vm198, %v197, %v184
        %s200 = sld [smem:[#allocation5 + %s133]]
        %s201 = scalar_lea.vmem %s4, %s200
        %v202 = vld [vmem:[%s201] sm:$0x1]
        %s203 = sld [smem:[#allocation5 + %s137]]
        %s204 = scalar_lea.vmem %s4, %s203
        %v205 = vld [vmem:[%s204] sm:$0x1]
        %s206 = sld [smem:[#allocation5 + %s141]]
        %s207 = scalar_lea.vmem %s4, %s206
        %v208 = vld [vmem:[%s207] sm:$0x1]
        %s209 = sld [smem:[#allocation5 + %s145]]
        %s210 = scalar_lea.vmem %s4, %s209
        %v211 = vld [vmem:[%s210] sm:$0x1]
        %s212 = sld [smem:[#allocation5 + %s149]]
        %s213 = scalar_lea.vmem %s4, %s212
        %v214 = vld [vmem:[%s213] sm:$0x1]
        %s215 = sld [smem:[#allocation5 + %s153]]
        %s216 = scalar_lea.vmem %s4, %s215
        %v217 = vld [vmem:[%s216] sm:$0x1]
        %s218 = sld [smem:[#allocation5 + %s157]]
        %s219 = scalar_lea.vmem %s4, %s218
        %v220 = vld [vmem:[%s219] sm:$0x1]
        %s221 = sld [smem:[#allocation5 + %s161]]
        %s222 = scalar_lea.vmem %s4, %s221
        %v223 = vld [vmem:[%s222] sm:$0x1]
        %v225 = vrot.slane %v205, 7
        %v228 = vrot.slane %v208, 6
        %v231 = vrot.slane %v211, 5
        %v234 = vrot.slane %v214, 4
        %v237 = vrot.slane %v217, 3
        %v240 = vrot.slane %v220, 2
        %v243 = vrot.slane %v223, 1
        %v245 = vsel %vm186, %v202, %v225
        %v246 = vsel %vm188, %v245, %v228
        %v247 = vsel %vm190, %v246, %v231
        %v248 = vsel %vm192, %v247, %v234
        %v249 = vsel %vm194, %v248, %v237
        %v250 = vsel %vm196, %v249, %v240
        %v251 = vsel %vm198, %v250, %v243
        %s252 = sld [smem:[#allocation6 + %s133]]
        %s253 = scalar_lea.vmem %s4, %s252
        %v254 = vld [vmem:[%s253] sm:$0x1]
        %s255 = sld [smem:[#allocation6 + %s137]]
        %s256 = scalar_lea.vmem %s4, %s255
        %v257 = vld [vmem:[%s256] sm:$0x1]
        %s258 = sld [smem:[#allocation6 + %s141]]
        %s259 = scalar_lea.vmem %s4, %s258
        %v260 = vld [vmem:[%s259] sm:$0x1]
        %s261 = sld [smem:[#allocation6 + %s145]]
        %s262 = scalar_lea.vmem %s4, %s261
        %v263 = vld [vmem:[%s262] sm:$0x1]
        %s264 = sld [smem:[#allocation6 + %s149]]
        %s265 = scalar_lea.vmem %s4, %s264
        %v266 = vld [vmem:[%s265] sm:$0x1]
        %s267 = sld [smem:[#allocation6 + %s153]]
        %s268 = scalar_lea.vmem %s4, %s267
        %v269 = vld [vmem:[%s268] sm:$0x1]
        %s270 = sld [smem:[#allocation6 + %s157]]
        %s271 = scalar_lea.vmem %s4, %s270
        %v272 = vld [vmem:[%s271] sm:$0x1]
        %s273 = sld [smem:[#allocation6 + %s161]]
        %s274 = scalar_lea.vmem %s4, %s273
        %v275 = vld [vmem:[%s274] sm:$0x1]
        %v277 = vrot.slane %v257, 7
        %v280 = vrot.slane %v260, 6
        %v283 = vrot.slane %v263, 5
        %v286 = vrot.slane %v266, 4
        %v289 = vrot.slane %v269, 3
        %v292 = vrot.slane %v272, 2
        %v295 = vrot.slane %v275, 1
        %v297 = vsel %vm186, %v254, %v277
        %v298 = vsel %vm188, %v297, %v280
        %v299 = vsel %vm190, %v298, %v283
        %v300 = vsel %vm192, %v299, %v286
        %v301 = vsel %vm194, %v300, %v289
        %v302 = vsel %vm196, %v301, %v292
        %v303 = vsel %vm198, %v302, %v295
        %v304 = vmul.f32 %v199, %v251
        %vm305 = vcmask 261120
        %v306 = vsel %vm305, %v304, 0.0
        %307 = vadd.xlane.f32.xlu0 %v306
        %v308 = vpop.xlane.xlu0 %307
        %v309 = vmul.f32 %v199, %v303
        %v310 = vsel %vm305, %v309, 0.0
        %311 = vadd.xlane.f32.xlu0 %v310
        %v312 = vpop.xlane.xlu0 %311
        %v313 = vmin.f32 %v308, 0.0
        %v314 = vand.u32 2147483647, %v308
        %v315 = vsub.f32 0.0, %v314
        %v316 = vmul.f32 %v315, 1.442695
        %v317 = vpow.pop %v316
        %v318 = vadd.f32 %v317, 1.0
        %v319 = vlog2.pop %v318
        %v320 = vmul.f32 %v319, 0.6931472
        %v321 = vmul.f32 -0.5, %v317
        %v322 = vadd.f32 %v321, 1.0
        %v323 = vmul.f32 %v322, %v317
        %v324 = vand.u32 2147483647, %v317
        %vm325 = vcmp.lt.f32.partialorder %v324, 0.0004427343
        %v326 = vsel %vm325, %v323, %v320
        %v327 = vsub.f32 %v313, %v326
        %v328 = vsub.f32 0.0, %v312
        %v329 = vmin.f32 %v328, 0.0
        %v330 = vand.u32 2147483647, %v328
        %v331 = vsub.f32 0.0, %v330
        %v332 = vmul.f32 %v331, 1.442695
        %v333 = vpow.pop %v332
        %v334 = vadd.f32 %v333, 1.0
        %v335 = vlog2.pop %v334
        %v336 = vmul.f32 %v335, 0.6931472
        %v337 = vmul.f32 -0.5, %v333
        %v338 = vadd.f32 %v337, 1.0
        %v339 = vmul.f32 %v338, %v333
        %v340 = vand.u32 2147483647, %v333
        %vm341 = vcmp.lt.f32.partialorder %v340, 0.0004427343
        %v342 = vsel %vm341, %v339, %v336
        %v343 = vsub.f32 %v329, %v342
        %v344 = vadd.f32 %v327, %v343
        %v345 = vlaneseq
        %v346 = vshrl.u32 %v345, 7
        %v347 = vstv %s133
        %v348 = vadd.s32 %v347, %v346
        %vm349 = vcmp.lt.s32.totalorder %v348, 32
        %v350 = vsel %vm349, %v344, 0.0
        %v351 = vld [vmem:[#allocation2] sm:$0x1]
        %vm352 = vcmask 7168
        %v353 = vsel %vm352, %v350, 0.0
        %354 = vadd.xlane.f32.xlu0 %v353
        %v355 = vpop.xlane.xlu0 %354
        %v356 = vrot.slane %v355, 4
        %v357 = vadd.f32 %v355, %v356
        %v358 = vrot.slane %v357, 2
        %v359 = vadd.f32 %v357, %v358
        %v360 = vrot.slane %v359, 1
        %v361 = vadd.f32 %v359, %v360
        %s362 = vtos %v361
        %v363 = vstv %s362
        %v364 = vadd.f32 %v351, %v363
        %vm365 = vcmask 0
        %366 = vst.msk [vmem:[#allocation2] sm:$0x1] %vm365, %v364
        %p367 = scmp.eq.s32.totalorder %s31, 3
        // Predicated region
        $region33: #{tpu_custom_call.1} parent=27 // pred_check
          %p368 = pneg %p367
        $region34: #{tpu_custom_call.1} parent=27 // pred_check_branch
          %370 = sbr.rel (%p368) target = $region36
        $region35: #{tpu_custom_call.1} parent=27 // pred_region
          %v371 = vld [vmem:[#allocation2] sm:$0x1]
          %v372 = vsub.f32 0.0, %v371
          %v373 = vrcp.pop 4.0
          %v374 = vmul.f32 %v372, %v373
          %375 = vst.msk [vmem:[#allocation7] sm:$0x1] %vm365, %v374
        $region36: #{tpu_custom_call.1} parent=27 // pred_fallthru
          _
        // Predicated region
        $region37: #{tpu_custom_call.1} parent=27 // pred_check
          %p376 = pneg %p86
        $region38: #{tpu_custom_call.1} parent=27 // pred_check_branch
          %378 = sbr.rel (%p376) target = $region40
        $region39: #{tpu_custom_call.1} parent=27 // pred_region
          %s380 = ssub.s32 16, 16
          %381 = vsyncadd [#allocation8], %s380
          %s383 = sshll.u32 [#allocation7], 4
          %s384 = int_to_ptr.vmem [resolvable:$true] %s383
          %386 = dma.vmem_to_hbm [thread:$0]  %s384, 16, %s5, [#allocation8]
        $region40: #{tpu_custom_call.1} parent=27 // pred_fallthru
          _
        // Predicated region
        $region41: #{tpu_custom_call.1} parent=27 // pred_check
          %p387 = pneg %p86
        $region42: #{tpu_custom_call.1} parent=27 // pred_check_branch
          %389 = sbr.rel (%p387) target = $region44
        $region43: #{tpu_custom_call.1} parent=27 // pred_region
          %390 = dma.done [#allocation8], 16
        $region44: #{tpu_custom_call.1} parent=27 // pred_fallthru
          _
      $region28: #{tpu_custom_call.1} parent=5 // pred_fallthru
        _
      %p391 = scmp.le.s32.totalorder 2, %s26
      // Predicated region
      $region45: #{tpu_custom_call.1} parent=5 // pred_check
        %p392 = pneg %p391
      $region46: #{tpu_custom_call.1} parent=5 // pred_check_branch
        %394 = sbr.rel (%p392) target = $region48
      $region47: #{tpu_custom_call.1} parent=5 // pred_region
        %s395 = ssub.s32 %s26, 2
      $region48: #{tpu_custom_call.1} parent=5 // pred_fallthru
        _
    $region6: #{tpu_custom_call.1} parent=1 // loop_footer
      %s30 = sadd.s32 1, %s26
    $region7: #{tpu_custom_call.1} parent=1 // loop_footer_branch
      %25 = sbr.rel target = $region3
    $region8: #{tpu_custom_call.1} parent=1 // loop_exit
      _
    %396 = vsyncpa [#allocation8], 1
    %s397 = scalar_lea.sflag [#allocation8], 1
    %398 = vsyncpa %s397, 1

</llo_original>
